<compile_context>
chip_gen: v5e
topology: v5e:2x2
jax: 0.10.0
libtpu: 0.0.40
codegen_flags: <defaults>
</compile_context>

<pallas_src>
import jax
import jax.numpy as jnp
from jax.experimental import pallas as pl
from jax.experimental.pallas import tpu as pltpu


def dqn_kernel(x_ref, w1_ref, b1_ref, w2_ref, b2_ref, o_ref):
    x = x_ref[...]                                                    # (tb, 4) batch-major block
    # fc1: contract the feature axis in-kernel (A @ B^T pattern) -> (16, tb).
    # Lane axis carries the batch, so bias + relu run on dense vregs.
    h = jax.lax.dot_general(w1_ref[...], x, (((1,), (1,)), ((), ())),
                            preferred_element_type=jnp.float32)       # (16, tb)
    h = jnp.maximum(h + b1_ref[...], 0.0)                             # (16,1) bias bcast + relu
    # fc2 in the same lane-dense layout.
    y = jnp.dot(w2_ref[...], h, preferred_element_type=jnp.float32)   # (2, tb)
    y = y + b2_ref[...]                                               # (2,1) bias bcast
    # Store batch-major so the HBM output is already (B, 2): one small XLU
    # transpose + masked vst per tile, no separate XLA transpose kernel.
    o_ref[...] = y.T.astype(o_ref.dtype)                              # (tb, 2)


def _round_up(n, m):
    return -(-n // m) * m


_MAX_TILE_ROWS = 4096      # keeps lane-padded (tb,4)/(tb,2) VMEM blocks well under limits
_PALLAS_MIN_BATCH = 1024   # below this, plain XLA fusion wins on launch overhead


def _tiling(batch):
    """Returns (padded_batch, tile_rows)."""
    if batch <= _MAX_TILE_ROWS:
        # One tile == the full array extent (always a legal block shape): fewest
        # grid steps, no padding, no output slice.  Best case for 1-TC v5e/v6e.
        return batch, batch
    # Large batches: an even number of tiles (v7x megacore balance), each <= 4096
    # rows, rows rounded to the sublane multiple of 128.
    n_tiles = _round_up(pl.cdiv(batch, _MAX_TILE_ROWS), 2)
    tb = _round_up(pl.cdiv(batch, n_tiles), 128)
    b_pad = _round_up(batch, tb)
    return b_pad, tb


def dqn_forward_pallas(x, w1, b1, w2, b2):
    """x: (B, 4) f32.  w1: (16, 4), b1: (16,), w2: (2, 16), b2: (2,) (PyTorch layout)."""
    B = x.shape[0]
    b_pad, tb = _tiling(B)
    if b_pad != B:
        # Only for large, non-tile-aligned batches; padded rows are sliced off below.
        x = jnp.pad(x, ((0, b_pad - B), (0, 0)))

    out = pl.pallas_call(
        dqn_kernel,
        out_shape=jax.ShapeDtypeStruct((b_pad, 2), jnp.float32),
        grid=(b_pad // tb,),
        in_specs=[
            pl.BlockSpec((tb, 4), lambda i: (i, 0)),    # activations: tiled over batch rows
            pl.BlockSpec((16, 4), lambda i: (0, 0)),    # weights/biases resident in VMEM
            pl.BlockSpec((16, 1), lambda i: (0, 0)),
            pl.BlockSpec((2, 16), lambda i: (0, 0)),
            pl.BlockSpec((2, 1), lambda i: (0, 0)),
        ],
        out_specs=pl.BlockSpec((tb, 2), lambda i: (i, 0)),   # (B, 2) written directly
        compiler_params=pltpu.CompilerParams(
            dimension_semantics=("parallel",),          # v7x: batch tiles across both TCs
            vmem_limit_bytes=32 * 1024 * 1024,
        ),
    )(x, w1, b1.reshape(16, 1), w2, b2.reshape(2, 1))

    return out if b_pad == B else out[:B]


def dqn_reference(x, w1, b1, w2, b2):
    hp = jax.lax.Precision.HIGHEST
    h = jnp.maximum(jnp.dot(x, w1.T, precision=hp) + b1, 0.0)
    return jnp.dot(h, w2.T, precision=hp) + b2


def dqn_forward(x, w1, b1, w2, b2):
    # Small/medium batches: a single fused XLA kernel beats the pallas_call's fixed
    # launch + DMA cost.  TODO(synk): benchmark the exact crossover per chip.
    if x.shape[0] < _PALLAS_MIN_BATCH:
        return dqn_reference(x, w1, b1, w2, b2)
    return dqn_forward_pallas(x, w1, b1, w2, b2)


def init_params(key):
    # PyTorch nn.Linear default init: U(-1/sqrt(fan_in), 1/sqrt(fan_in)), (out, in) layout.
    k1, k2, k3, k4 = jax.random.split(key, 4)
    bound1 = 1.0 / jnp.sqrt(4.0)
    bound2 = 1.0 / jnp.sqrt(16.0)
    w1 = jax.random.uniform(k1, (16, 4), jnp.float32, -bound1, bound1)
    b1 = jax.random.uniform(k2, (16,), jnp.float32, -bound1, bound1)
    w2 = jax.random.uniform(k3, (2, 16), jnp.float32, -bound2, bound2)
    b2 = jax.random.uniform(k4, (2,), jnp.float32, -bound2, bound2)
    return w1, b1, w2, b2


if __name__ == "__main__":
    key = jax.random.PRNGKey(0)
    kx, kb, kr, kp = jax.random.split(key, 4)
    w1, b1, w2, b2 = init_params(kp)

    # 1) Small shape implied by the module (batch=2 states of dim 4): force the
    #    Pallas path (single tile, no padding) so the kernel itself runs.
    x_small = jax.random.normal(kx, (2, 4), jnp.float32)
    out_small = dqn_forward_pallas(x_small, w1, b1, w2, b2)
    jax.block_until_ready(out_small)
    ref_small = dqn_reference(x_small, w1, b1, w2, b2)
    assert out_small.shape == (2, 2)
    assert jnp.allclose(out_small, ref_small, atol=1e-4, rtol=1e-4)

    # 2) Replay-buffer-sized batch: one 2048-row tile (fewest grid steps).
    x_big = jax.random.normal(kb, (2048, 4), jnp.float32)
    out_big = dqn_forward(x_big, w1, b1, w2, b2)
    jax.block_until_ready(out_big)
    ref_big = dqn_reference(x_big, w1, b1, w2, b2)
    assert out_big.shape == (2048, 2)
    assert jnp.allclose(out_big, ref_big, atol=1e-4, rtol=1e-4)

    # 3) Large ragged batch: even multi-tile grid (v7x megacore) + pad/slice path.
    x_large = jax.random.normal(kr, (10000, 4), jnp.float32)
    out_large = dqn_forward(x_large, w1, b1, w2, b2)
    jax.block_until_ready(out_large)
    ref_large = dqn_reference(x_large, w1, b1, w2, b2)
    assert out_large.shape == (10000, 2)
    assert jnp.allclose(out_large, ref_large, atol=1e-4, rtol=1e-4)

    print("KERNEL_OK")
</pallas_src>

<mosaic_0001>
module attributes {stable_mosaic.version = 11 : i64} {
  func.func @dqn_kernel(%arg0: i32, %arg1: memref<2x4xf32, #tpu.memory_space<vmem>>, %arg2: memref<16x4xf32, #tpu.memory_space<vmem>>, %arg3: memref<16x1xf32, #tpu.memory_space<vmem>>, %arg4: memref<2x16xf32, #tpu.memory_space<vmem>>, %arg5: memref<2x1xf32, #tpu.memory_space<vmem>>, %arg6: memref<2x2xf32, #tpu.memory_space<vmem>>) attributes {dimension_semantics = [#tpu.dimension_semantics<parallel>], iteration_bounds = array<i64: 1>, scalar_prefetch = 0 : i64, scratch_operands = 0 : i64, tpu.core_type = #tpu.core_type<tc>, window_params = [{transform_indices = @transform_0, window_bounds = array<i64: 2, 4>}, {pipeline_mode = #tpu.pipeline_mode<synchronous>, transform_indices = @transform_1, window_bounds = array<i64: 16, 4>}, {pipeline_mode = #tpu.pipeline_mode<synchronous>, transform_indices = @transform_2, window_bounds = array<i64: 16, 1>}, {pipeline_mode = #tpu.pipeline_mode<synchronous>, transform_indices = @transform_3, window_bounds = array<i64: 2, 16>}, {pipeline_mode = #tpu.pipeline_mode<synchronous>, transform_indices = @transform_4, window_bounds = array<i64: 2, 1>}, {transform_indices = @transform_5, window_bounds = array<i64: 2, 2>}]} {
    %c0 = arith.constant 0 : index
    %c0_0 = arith.constant 0 : index
    %0 = vector.load %arg1[%c0, %c0_0] : memref<2x4xf32, #tpu.memory_space<vmem>>, vector<2x4xf32>
    %c0_1 = arith.constant 0 : index
    %c0_2 = arith.constant 0 : index
    %1 = vector.load %arg2[%c0_1, %c0_2] : memref<16x4xf32, #tpu.memory_space<vmem>>, vector<16x4xf32>
    %cst = arith.constant dense<0.000000e+00> : vector<16x2xf32>
    %2 = tpu.matmul %1, %0, %cst {dimension_numbers = #tpu.dot_dimension_numbers<[1], [1], [0], [0], [0, 0, 1, 0], [], []>} : vector<16x4xf32>, vector<2x4xf32>, vector<16x2xf32> -> vector<16x2xf32>
    %c0_3 = arith.constant 0 : index
    %c0_4 = arith.constant 0 : index
    %3 = vector.load %arg3[%c0_3, %c0_4] : memref<16x1xf32, #tpu.memory_space<vmem>>, vector<16x1xf32>
    %4 = vector.broadcast %3 : vector<16x1xf32> to vector<16x2xf32>
    %5 = arith.addf %2, %4 : vector<16x2xf32>
    %cst_5 = arith.constant 0.000000e+00 : f32
    %6 = vector.broadcast %cst_5 : f32 to vector<16x2xf32>
    %7 = arith.maximumf %5, %6 : vector<16x2xf32>
    %c0_6 = arith.constant 0 : index
    %c0_7 = arith.constant 0 : index
    %8 = vector.load %arg4[%c0_6, %c0_7] : memref<2x16xf32, #tpu.memory_space<vmem>>, vector<2x16xf32>
    %cst_8 = arith.constant dense<0.000000e+00> : vector<2x2xf32>
    %9 = tpu.matmul %8, %7, %cst_8 {dimension_numbers = #tpu.dot_dimension_numbers<[1], [0], [0], [1], [0, 0, 1, 1], [], []>} : vector<2x16xf32>, vector<16x2xf32>, vector<2x2xf32> -> vector<2x2xf32>
    %c0_9 = arith.constant 0 : index
    %c0_10 = arith.constant 0 : index
    %10 = vector.load %arg5[%c0_9, %c0_10] : memref<2x1xf32, #tpu.memory_space<vmem>>, vector<2x1xf32>
    %11 = vector.broadcast %10 : vector<2x1xf32> to vector<2x2xf32>
    %12 = arith.addf %9, %11 : vector<2x2xf32>
    %13 = tpu.transpose %12, [1, 0] : vector<2x2xf32> -> vector<2x2xf32>
    %c0_11 = arith.constant 0 : index
    %c0_12 = arith.constant 0 : index
    %14 = vector.load %arg6[%c0_11, %c0_12] : memref<2x2xf32, #tpu.memory_space<vmem>>, vector<2x2xf32>
    tpu.vector_store %arg6[%c0_11, %c0_12], %13 {strides = array<i32>} : memref<2x2xf32, #tpu.memory_space<vmem>>, vector<2x2xf32>,
    return
  }
  func.func @transform_0(%arg0: i32) -> (i32, i32) {
    %c0_i32 = arith.constant 0 : i32
    %c0_i32_0 = arith.constant 0 : i32
    return %arg0, %c0_i32 : i32, i32
  }
  func.func @transform_1(%arg0: i32) -> (i32, i32) {
    %c0_i32 = arith.constant 0 : i32
    %c0_i32_0 = arith.constant 0 : i32
    %c0_i32_1 = arith.constant 0 : i32
    return %c0_i32, %c0_i32_0 : i32, i32
  }
  func.func @transform_2(%arg0: i32) -> (i32, i32) {
    %c0_i32 = arith.constant 0 : i32
    %c0_i32_0 = arith.constant 0 : i32
    %c0_i32_1 = arith.constant 0 : i32
    return %c0_i32, %c0_i32_0 : i32, i32
  }
  func.func @transform_3(%arg0: i32) -> (i32, i32) {
    %c0_i32 = arith.constant 0 : i32
    %c0_i32_0 = arith.constant 0 : i32
    %c0_i32_1 = arith.constant 0 : i32
    return %c0_i32, %c0_i32_0 : i32, i32
  }
  func.func @transform_4(%arg0: i32) -> (i32, i32) {
    %c0_i32 = arith.constant 0 : i32
    %c0_i32_0 = arith.constant 0 : i32
    %c0_i32_1 = arith.constant 0 : i32
    return %c0_i32, %c0_i32_0 : i32, i32
  }
  func.func @transform_5(%arg0: i32) -> (i32, i32) {
    %c0_i32 = arith.constant 0 : i32
    %c0_i32_0 = arith.constant 0 : i32
    return %arg0, %c0_i32 : i32, i32
  }
}

</mosaic_0001>

<llo_original>
// kernel: tpu_custom_call.1
$region0: #{tpu_custom_call.1}
  #allocation0 [shape = 'u32[]', space=smem, size = 0x4, offset = 0x4, fixed_abs, tag = 'smem constant byte address 0x4 - core index']
  #allocation1 [shape = 'u32[72,128]{1,0:T(1,128)}', space=vmem, size = 0x9000, scoped, tag = 'internal scratch']
  %s0 = inlined_call_operand.vmem [shape: f32[2,4], index: 0, kind: input, shape index: {}]
  %s1 = inlined_call_operand.vmem [shape: f32[16,4], index: 1, kind: input, shape index: {}]
  %s2 = inlined_call_operand.vmem [shape: f32[16,1], index: 2, kind: input, shape index: {}]
  %s3 = inlined_call_operand.vmem [shape: f32[2,16], index: 3, kind: input, shape index: {}]
  %s4 = inlined_call_operand.vmem [shape: f32[2,1], index: 4, kind: input, shape index: {}]
  %s5 = inlined_call_operand.hbm [shape: f32[2,2], index: 5, kind: output, shape index: {}]
  %s6 = sld [smem:[#allocation0]]
  $region30: #{tpu_custom_call.1} parent=0
    _
  %s8 = ssub.s32 1, %s6
  %s9 = scalar_select 0, %s8, %s6
  $region1: #{tpu_custom_call.1} parent=0
    #allocation2 [shape = 'u8[1024]{0}', space=vmem, size = 0x400, scoped, tag = 'output window, operand 0, single buffered']
    #allocation3 [shape = 's32[1]{0}', space=sflag, size = 0x4, scoped, tag = 'scoped memory for tpu_custom_call.1']
    %10 = vsyncpa [#allocation3], 0
    // Predicated region
    $region2: #{tpu_custom_call.1} parent=1 // pred_check
      _
    $region3: #{tpu_custom_call.1} parent=1 // pred_check_branch
      %12 = sbr.rel (0) target = $region5
    $region4: #{tpu_custom_call.1} parent=1 // pred_region
      _
    $region5: #{tpu_custom_call.1} parent=1 // pred_fallthru
      _
    // Predicated region
    $region6: #{tpu_custom_call.1} parent=1 // pred_check
      _
    $region7: #{tpu_custom_call.1} parent=1 // pred_check_branch
      %14 = sbr.rel (0) target = $region9
    $region8: #{tpu_custom_call.1} parent=1 // pred_region
      _
    $region9: #{tpu_custom_call.1} parent=1 // pred_fallthru
      _
    // Predicated region
    $region10: #{tpu_custom_call.1} parent=1 // pred_check
      _
    $region11: #{tpu_custom_call.1} parent=1 // pred_check_branch
      %16 = sbr.rel (0) target = $region13
    $region12: #{tpu_custom_call.1} parent=1 // pred_region
      _
    $region13: #{tpu_custom_call.1} parent=1 // pred_fallthru
      _
    // Predicated region
    $region14: #{tpu_custom_call.1} parent=1 // pred_check
      _
    $region15: #{tpu_custom_call.1} parent=1 // pred_check_branch
      %18 = sbr.rel (0) target = $region17
    $region16: #{tpu_custom_call.1} parent=1 // pred_region
      _
    $region17: #{tpu_custom_call.1} parent=1 // pred_fallthru
      _
    // Predicated region
    $region18: #{tpu_custom_call.1} parent=1 // pred_check
      _
    $region19: #{tpu_custom_call.1} parent=1 // pred_check_branch
      %20 = sbr.rel (0) target = $region21
    $region20: #{tpu_custom_call.1} parent=1 // pred_region
      _
    $region21: #{tpu_custom_call.1} parent=1 // pred_fallthru
      _
    %v21 = vld [vmem:[%s0] sm:$0x3]
    %v22 = vld [vmem:[%s1] sm:$0xff]
    %v23 = vld [vmem:[%s1 + $0x8] sm:$0xff]
    %v24 = vld [vmem:[%s2] sm:$0xff]
    %v25 = vld [vmem:[%s2 + $0x8] sm:$0xff]
    %27 = vset.pattern.permute.xlu0 0
    %28 = vperm.xlu0 %27, %v24
    %v29 = vpop.permute.xlu0 %28
    %32 = vset.pattern.permute.xlu0 0
    %33 = vperm.xlu0 %32, %v25
    %v34 = vpop.permute.xlu0 %33
    %vm36 = vcmask 31744
    %v38 = vsel %vm36, %v22, 0
    %v41 = vsel %vm36, %v23, 0
    %v44 = vsel %vm36, %v21, 0
    %46 = vmatpush.xpose.msra.mxu0 0.0
    %47 = vmatpush.xpose.msra.mxu0 0.0
    %48 = vmatpush.xpose.msra.mxu0 0.0
    %49 = vmatpush.xpose.msra.mxu0 0.0
    %50 = vmatpush.xpose.msra.mxu0 0.0
    %51 = vmatpush.xpose.msra.mxu0 0.0
    %52 = vmatpush.xpose.msra.mxu0 0.0
    %53 = vmatpush.xpose.msra.mxu0 0.0
    %54 = vmatpush.xpose.msra.mxu0 0.0
    %55 = vmatpush.xpose.msra.mxu0 0.0
    %56 = vmatpush.xpose.msra.mxu0 0.0
    %57 = vmatpush.xpose.msra.mxu0 0.0
    %58 = vmatpush.xpose.msra.mxu0 0.0
    %59 = vmatpush.xpose.msra.mxu0 0.0
    %60 = vmatpush.xpose.msra.mxu0 0.0
    %61 = vmatpush.xpose.msra.mxu0 %v44
    %62 = vmatmul.f32.gmra.mxu0 %v38
    %v63 = vpop.f32.mrf.mxu0
    %v64 = vadd.f32 %v29, %v63
    %65 = vmatmul.f32.gmra.mxu0 %v41
    %v66 = vpop.f32.mrf.mxu0
    %v67 = vadd.f32 %v34, %v66
    %68 = vdwg.mxu0
    %v69 = vmax.f32 %v64, 0.0
    %v70 = vmax.f32 %v67, 0.0
    %v71 = vld [vmem:[%s3] sm:$0x3]
    %v72 = vld [vmem:[%s4] sm:$0x3]
    %74 = vset.pattern.permute.xlu0 0
    %75 = vperm.xlu0 %74, %v72
    %v76 = vpop.permute.xlu0 %75
    %vm78 = vcmask 130048
    %v80 = vsel %vm78, %v71, 0
    %82 = vmatpush.msra.mxu0 0.0
    %83 = vmatpush.msra.mxu0 0.0
    %84 = vmatpush.msra.mxu0 0.0
    %85 = vmatpush.msra.mxu0 0.0
    %86 = vmatpush.msra.mxu0 0.0
    %87 = vmatpush.msra.mxu0 0.0
    %88 = vmatpush.msra.mxu0 0.0
    %89 = vmatpush.msra.mxu0 0.0
    %90 = vmatpush.msra.mxu0 0.0
    %91 = vmatpush.msra.mxu0 0.0
    %92 = vmatpush.msra.mxu0 0.0
    %93 = vmatpush.msra.mxu0 0.0
    %94 = vmatpush.msra.mxu0 0.0
    %95 = vmatpush.msra.mxu0 0.0
    %96 = vmatpush.msra.mxu0 %v70
    %97 = vmatpush.msra.mxu0 %v69
    %98 = vmatmul.f32.gmra.mxu0 %v80
    %v99 = vpop.f32.mrf.mxu0
    %v100 = vadd.f32 %v76, %v99
    %101 = vdwg.mxu0
    %102 = vxpose.xlu0.b32.start [1/16] %v100, 128
    %103 = vxpose.xlu0.b32.cont [2/16] 0.0, 128
    %104 = vxpose.xlu0.b32.cont [3/16] 0.0, 128
    %105 = vxpose.xlu0.b32.cont [4/16] 0.0, 128
    %106 = vxpose.xlu0.b32.cont [5/16] 0.0, 128
    %107 = vxpose.xlu0.b32.cont [6/16] 0.0, 128
    %108 = vxpose.xlu0.b32.cont [7/16] 0.0, 128
    %109 = vxpose.xlu0.b32.cont [8/16] 0.0, 128
    %110 = vxpose.xlu0.b32.cont [9/16] 0.0, 128
    %111 = vxpose.xlu0.b32.cont [10/16] 0.0, 128
    %112 = vxpose.xlu0.b32.cont [11/16] 0.0, 128
    %113 = vxpose.xlu0.b32.cont [12/16] 0.0, 128
    %114 = vxpose.xlu0.b32.cont [13/16] 0.0, 128
    %115 = vxpose.xlu0.b32.cont [14/16] 0.0, 128
    %116 = vxpose.xlu0.b32.cont [15/16] 0.0, 128
    %117 = vxpose.xlu0.b32.end [16/16] 0.0, 128
    %v118 = vpop.trf.xlu0
    %v119 = vpop.trf.xlu0
    %v120 = vpop.trf.xlu0
    %v121 = vpop.trf.xlu0
    %v122 = vpop.trf.xlu0
    %v123 = vpop.trf.xlu0
    %v124 = vpop.trf.xlu0
    %v125 = vpop.trf.xlu0
    %v126 = vpop.trf.xlu0
    %v127 = vpop.trf.xlu0
    %v128 = vpop.trf.xlu0
    %v129 = vpop.trf.xlu0
    %v130 = vpop.trf.xlu0
    %v131 = vpop.trf.xlu0
    %v132 = vpop.trf.xlu0
    %v133 = vpop.trf.xlu0
    %vm134 = vcmask 9216
    %135 = vst.msk [vmem:[#allocation2] sm:$0x3] %vm134, %v118
    // Predicated region
    $region22: #{tpu_custom_call.1} parent=1 // pred_check
      _
    $region23: #{tpu_custom_call.1} parent=1 // pred_check_branch
      %137 = sbr.rel (0) target = $region25
    $region24: #{tpu_custom_call.1} parent=1 // pred_region
      %139 = vsyncadd [#allocation3], 0
      %s141 = sshll.u32 [#allocation2], 4
      %s142 = int_to_ptr.vmem [resolvable:$true] %s141
      %s143 = sshll.u32 %s5, 4
      %s144 = int_to_ptr.hbm [resolvable:$true] %s143
      %146 = dma.vmem_to_hbm [thread:$0]  %s142, 32, %s144, [#allocation3]
    $region25: #{tpu_custom_call.1} parent=1 // pred_fallthru
      _
    // Predicated region
    $region26: #{tpu_custom_call.1} parent=1 // pred_check
      _
    $region27: #{tpu_custom_call.1} parent=1 // pred_check_branch
      %148 = sbr.rel (0) target = $region29
    $region28: #{tpu_custom_call.1} parent=1 // pred_region
      %150 = dma.done [#allocation3], 32
    $region29: #{tpu_custom_call.1} parent=1 // pred_fallthru
      _
    %151 = vsyncpa [#allocation3], 1

</llo_original>
